<compile_context>
chip_gen: v5e
topology: v5e:2x2
jax: 0.10.0
libtpu: 0.0.40
codegen_flags: <defaults>
</compile_context>

<pallas_src>
import jax
import jax.numpy as jnp
from jax.experimental import pallas as pl
from jax.experimental.pallas import tpu as pltpu


def genhumps5_kernel(x_ref, o_ref):
    # x_ref: (5, TR, C) f32 in VMEM, o_ref: (TR, C) f32 in VMEM.
    x = x_ref[...]                               # (5, TR, C)
    # sin(2x)^2 == 0.5 * (1 - cos(4x))  -> one EUP transcendental per element.
    s2 = 0.5 * (1.0 - jnp.cos(4.0 * x))          # (5, TR, C)

    # Fused single reduction over the 4 consecutive pairs: pure VPU adds of
    # full (TR, C) vreg slabs — no XLU reduce, no broadcast constants.
    total = s2[0] * s2[1] + 0.05 * (x[0] * x[0] + x[1] * x[1])
    for i in range(1, 4):
        total = total + s2[i] * s2[i + 1] + 0.05 * (x[i] * x[i] + x[i + 1] * x[i + 1])

    o_ref[...] = total


def genhumps5_batched(xb, *, cols=512, block_rows=512, vmem_limit_bytes=None):
    """xb: (5, N) float32 -> (N,) float32, f(x) per batch column.

    Layout: (5, N) is reshaped to (5, R, C) with C=cols lanes and R=ceil(N/C)
    rows; one grid step processes (5, TR, C) -> (TR, C).  Defaults give
    ~262K columns (~12 MiB double-buffered) per step; shrink cols/block_rows
    for tiny N or raise vmem_limit_bytes for bigger tiles on v6e.
    """
    xb = jnp.asarray(xb, jnp.float32)
    five, n = xb.shape
    assert five == 5, "expected input of shape (5, N)"
    assert cols % 128 == 0, "cols must be a multiple of 128 (lane width)"
    assert block_rows % 8 == 0, "block_rows must be a multiple of 8 (sublanes)"

    r = pl.cdiv(n, cols)
    n_pad = r * cols
    if n_pad != n:
        # Pad at most cols-1 columns so the reshape is exact; zero columns
        # evaluate to f=0 and are sliced off below.
        xb = jnp.pad(xb, ((0, 0), (0, n_pad - n)))
    x3 = xb.reshape(5, r, cols)

    # Row tile: multiple of 8, or the full (possibly small) row extent.
    tr = r if r <= block_rows else block_rows
    grid = (pl.cdiv(r, tr),)

    params = dict(dimension_semantics=("parallel",))
    if vmem_limit_bytes is not None:
        params["vmem_limit_bytes"] = vmem_limit_bytes

    out = pl.pallas_call(
        genhumps5_kernel,
        out_shape=jax.ShapeDtypeStruct((r, cols), jnp.float32),
        grid=grid,
        in_specs=[pl.BlockSpec((5, tr, cols), lambda i: (0, i, 0))],
        out_specs=pl.BlockSpec((tr, cols), lambda i: (i, 0)),
        compiler_params=pltpu.CompilerParams(**params),
        cost_estimate=pl.CostEstimate(
            flops=12 * n_pad,
            transcendentals=5 * n_pad,
            bytes_accessed=24 * n_pad,
        ),
    )(x3)
    return out.reshape(n_pad)[:n]


def genhumps5(x):
    """x: (5,) float32 -> scalar float32 (same semantics as the torch module).

    Per the perf review, a single 5-element evaluation is >100x dominated by
    kernel dispatch overhead, so it is computed with the plain-JAX expression;
    batched evaluation goes through the Pallas kernel (genhumps5_batched).
    """
    x = jnp.asarray(x, jnp.float32)
    s2 = jnp.sin(2.0 * x) ** 2
    q = x * x
    return jnp.sum(s2[0:4] * s2[1:5] + 0.05 * (q[0:4] + q[1:5]))


# ---------------------------------------------------------------------------
# Pure-JAX references for correctness checking.
# ---------------------------------------------------------------------------
def genhumps5_ref(x):
    x = jnp.asarray(x, jnp.float32)
    s2 = jnp.sin(2.0 * x) ** 2
    q = x * x
    return jnp.sum(s2[0:4] * s2[1:5] + 0.05 * (q[0:4] + q[1:5]))


def genhumps5_ref_batched(xb):
    xb = jnp.asarray(xb, jnp.float32)
    s2 = jnp.sin(2.0 * xb) ** 2
    q = xb * xb
    return jnp.sum(s2[0:4] * s2[1:5] + 0.05 * (q[0:4] + q[1:5]), axis=0)


if __name__ == "__main__":
    key = jax.random.PRNGKey(0)
    k1, k2 = jax.random.split(key)

    # Batched Pallas kernel at a small shape: cols=128, block_rows=8
    # -> r=16, tr=8, grid of 2 steps (exercises the pipeline).
    xb = jax.random.normal(k1, (5, 2048), dtype=jnp.float32)
    yb = genhumps5_batched(xb, cols=128, block_rows=8)
    jax.block_until_ready(yb)
    yb_ref = genhumps5_ref_batched(xb)
    assert yb.shape == (2048,)
    assert jnp.allclose(yb, yb_ref, rtol=1e-5, atol=1e-5), (yb[:4], yb_ref[:4])

    # Ragged N (exercises the small tail pad + output slice).
    xr = jax.random.normal(k2, (5, 1000), dtype=jnp.float32)
    yr = genhumps5_batched(xr, cols=128, block_rows=8)
    jax.block_until_ready(yr)
    yr_ref = genhumps5_ref_batched(xr)
    assert yr.shape == (1000,)
    assert jnp.allclose(yr, yr_ref, rtol=1e-5, atol=1e-5), (yr[:4], yr_ref[:4])

    # Single-vector (module-equivalent) forward + cross-check against the
    # kernel evaluating the same vector as one batch column.
    x = jax.random.normal(key, (5,), dtype=jnp.float32)
    y = genhumps5(x)
    jax.block_until_ready(y)
    y_ref = genhumps5_ref(x)
    assert jnp.allclose(y, y_ref, rtol=1e-5, atol=1e-5), (y, y_ref)
    y_kernel = genhumps5_batched(x.reshape(5, 1), cols=128, block_rows=8)[0]
    jax.block_until_ready(y_kernel)
    assert jnp.allclose(y_kernel, y_ref, rtol=1e-5, atol=1e-5), (y_kernel, y_ref)

    print("KERNEL_OK")
</pallas_src>

<mosaic_0001>
module attributes {stable_mosaic.version = 11 : i64} {
  func.func @genhumps5_kernel(%arg0: i32, %arg1: memref<5x8x128xf32, #tpu.memory_space<vmem>>, %arg2: memref<8x128xf32, #tpu.memory_space<vmem>>) attributes {dimension_semantics = [#tpu.dimension_semantics<parallel>], iteration_bounds = array<i64: 2>, scalar_prefetch = 0 : i64, scratch_operands = 0 : i64, tpu.core_type = #tpu.core_type<tc>, window_params = [{transform_indices = @transform_0, window_bounds = array<i64: 5, 8, 128>}, {transform_indices = @transform_1, window_bounds = array<i64: 8, 128>}]} {
    %c0 = arith.constant 0 : index
    %c0_0 = arith.constant 0 : index
    %c0_1 = arith.constant 0 : index
    %0 = vector.load %arg1[%c0, %c0_0, %c0_1] : memref<5x8x128xf32, #tpu.memory_space<vmem>>, vector<5x8x128xf32>
    %cst = arith.constant 4.000000e+00 : f32
    %1 = vector.broadcast %cst : f32 to vector<5x8x128xf32>
    %2 = arith.mulf %1, %0 : vector<5x8x128xf32>
    %3 = math.cos %2 : vector<5x8x128xf32>
    %cst_2 = arith.constant 1.000000e+00 : f32
    %4 = vector.broadcast %cst_2 : f32 to vector<5x8x128xf32>
    %5 = arith.subf %4, %3 : vector<5x8x128xf32>
    %cst_3 = arith.constant 5.000000e-01 : f32
    %6 = vector.broadcast %cst_3 : f32 to vector<5x8x128xf32>
    %7 = arith.mulf %6, %5 : vector<5x8x128xf32>
    %8 = vector.extract_strided_slice %7 {offsets = [0, 0, 0], sizes = [1, 8, 128], strides = [1, 1, 1]} : vector<5x8x128xf32> to vector<1x8x128xf32>
    %9 = vector.shape_cast %8 : vector<1x8x128xf32> to vector<8x128xf32>
    %10 = vector.extract_strided_slice %7 {offsets = [1, 0, 0], sizes = [1, 8, 128], strides = [1, 1, 1]} : vector<5x8x128xf32> to vector<1x8x128xf32>
    %11 = vector.shape_cast %10 : vector<1x8x128xf32> to vector<8x128xf32>
    %12 = arith.mulf %9, %11 : vector<8x128xf32>
    %13 = vector.extract_strided_slice %0 {offsets = [0, 0, 0], sizes = [1, 8, 128], strides = [1, 1, 1]} : vector<5x8x128xf32> to vector<1x8x128xf32>
    %14 = vector.shape_cast %13 : vector<1x8x128xf32> to vector<8x128xf32>
    %15 = vector.extract_strided_slice %0 {offsets = [0, 0, 0], sizes = [1, 8, 128], strides = [1, 1, 1]} : vector<5x8x128xf32> to vector<1x8x128xf32>
    %16 = vector.shape_cast %15 : vector<1x8x128xf32> to vector<8x128xf32>
    %17 = arith.mulf %14, %16 : vector<8x128xf32>
    %18 = vector.extract_strided_slice %0 {offsets = [1, 0, 0], sizes = [1, 8, 128], strides = [1, 1, 1]} : vector<5x8x128xf32> to vector<1x8x128xf32>
    %19 = vector.shape_cast %18 : vector<1x8x128xf32> to vector<8x128xf32>
    %20 = vector.extract_strided_slice %0 {offsets = [1, 0, 0], sizes = [1, 8, 128], strides = [1, 1, 1]} : vector<5x8x128xf32> to vector<1x8x128xf32>
    %21 = vector.shape_cast %20 : vector<1x8x128xf32> to vector<8x128xf32>
    %22 = arith.mulf %19, %21 : vector<8x128xf32>
    %23 = arith.addf %17, %22 : vector<8x128xf32>
    %cst_4 = arith.constant 5.000000e-02 : f32
    %24 = vector.broadcast %cst_4 : f32 to vector<8x128xf32>
    %25 = arith.mulf %24, %23 : vector<8x128xf32>
    %26 = arith.addf %12, %25 : vector<8x128xf32>
    %27 = vector.extract_strided_slice %7 {offsets = [1, 0, 0], sizes = [1, 8, 128], strides = [1, 1, 1]} : vector<5x8x128xf32> to vector<1x8x128xf32>
    %28 = vector.shape_cast %27 : vector<1x8x128xf32> to vector<8x128xf32>
    %29 = vector.extract_strided_slice %7 {offsets = [2, 0, 0], sizes = [1, 8, 128], strides = [1, 1, 1]} : vector<5x8x128xf32> to vector<1x8x128xf32>
    %30 = vector.shape_cast %29 : vector<1x8x128xf32> to vector<8x128xf32>
    %31 = arith.mulf %28, %30 : vector<8x128xf32>
    %32 = arith.addf %26, %31 : vector<8x128xf32>
    %33 = vector.extract_strided_slice %0 {offsets = [1, 0, 0], sizes = [1, 8, 128], strides = [1, 1, 1]} : vector<5x8x128xf32> to vector<1x8x128xf32>
    %34 = vector.shape_cast %33 : vector<1x8x128xf32> to vector<8x128xf32>
    %35 = vector.extract_strided_slice %0 {offsets = [1, 0, 0], sizes = [1, 8, 128], strides = [1, 1, 1]} : vector<5x8x128xf32> to vector<1x8x128xf32>
    %36 = vector.shape_cast %35 : vector<1x8x128xf32> to vector<8x128xf32>
    %37 = arith.mulf %34, %36 : vector<8x128xf32>
    %38 = vector.extract_strided_slice %0 {offsets = [2, 0, 0], sizes = [1, 8, 128], strides = [1, 1, 1]} : vector<5x8x128xf32> to vector<1x8x128xf32>
    %39 = vector.shape_cast %38 : vector<1x8x128xf32> to vector<8x128xf32>
    %40 = vector.extract_strided_slice %0 {offsets = [2, 0, 0], sizes = [1, 8, 128], strides = [1, 1, 1]} : vector<5x8x128xf32> to vector<1x8x128xf32>
    %41 = vector.shape_cast %40 : vector<1x8x128xf32> to vector<8x128xf32>
    %42 = arith.mulf %39, %41 : vector<8x128xf32>
    %43 = arith.addf %37, %42 : vector<8x128xf32>
    %cst_5 = arith.constant 5.000000e-02 : f32
    %44 = vector.broadcast %cst_5 : f32 to vector<8x128xf32>
    %45 = arith.mulf %44, %43 : vector<8x128xf32>
    %46 = arith.addf %32, %45 : vector<8x128xf32>
    %47 = vector.extract_strided_slice %7 {offsets = [2, 0, 0], sizes = [1, 8, 128], strides = [1, 1, 1]} : vector<5x8x128xf32> to vector<1x8x128xf32>
    %48 = vector.shape_cast %47 : vector<1x8x128xf32> to vector<8x128xf32>
    %49 = vector.extract_strided_slice %7 {offsets = [3, 0, 0], sizes = [1, 8, 128], strides = [1, 1, 1]} : vector<5x8x128xf32> to vector<1x8x128xf32>
    %50 = vector.shape_cast %49 : vector<1x8x128xf32> to vector<8x128xf32>
    %51 = arith.mulf %48, %50 : vector<8x128xf32>
    %52 = arith.addf %46, %51 : vector<8x128xf32>
    %53 = vector.extract_strided_slice %0 {offsets = [2, 0, 0], sizes = [1, 8, 128], strides = [1, 1, 1]} : vector<5x8x128xf32> to vector<1x8x128xf32>
    %54 = vector.shape_cast %53 : vector<1x8x128xf32> to vector<8x128xf32>
    %55 = vector.extract_strided_slice %0 {offsets = [2, 0, 0], sizes = [1, 8, 128], strides = [1, 1, 1]} : vector<5x8x128xf32> to vector<1x8x128xf32>
    %56 = vector.shape_cast %55 : vector<1x8x128xf32> to vector<8x128xf32>
    %57 = arith.mulf %54, %56 : vector<8x128xf32>
    %58 = vector.extract_strided_slice %0 {offsets = [3, 0, 0], sizes = [1, 8, 128], strides = [1, 1, 1]} : vector<5x8x128xf32> to vector<1x8x128xf32>
    %59 = vector.shape_cast %58 : vector<1x8x128xf32> to vector<8x128xf32>
    %60 = vector.extract_strided_slice %0 {offsets = [3, 0, 0], sizes = [1, 8, 128], strides = [1, 1, 1]} : vector<5x8x128xf32> to vector<1x8x128xf32>
    %61 = vector.shape_cast %60 : vector<1x8x128xf32> to vector<8x128xf32>
    %62 = arith.mulf %59, %61 : vector<8x128xf32>
    %63 = arith.addf %57, %62 : vector<8x128xf32>
    %cst_6 = arith.constant 5.000000e-02 : f32
    %64 = vector.broadcast %cst_6 : f32 to vector<8x128xf32>
    %65 = arith.mulf %64, %63 : vector<8x128xf32>
    %66 = arith.addf %52, %65 : vector<8x128xf32>
    %67 = vector.extract_strided_slice %7 {offsets = [3, 0, 0], sizes = [1, 8, 128], strides = [1, 1, 1]} : vector<5x8x128xf32> to vector<1x8x128xf32>
    %68 = vector.shape_cast %67 : vector<1x8x128xf32> to vector<8x128xf32>
    %69 = vector.extract_strided_slice %7 {offsets = [4, 0, 0], sizes = [1, 8, 128], strides = [1, 1, 1]} : vector<5x8x128xf32> to vector<1x8x128xf32>
    %70 = vector.shape_cast %69 : vector<1x8x128xf32> to vector<8x128xf32>
    %71 = arith.mulf %68, %70 : vector<8x128xf32>
    %72 = arith.addf %66, %71 : vector<8x128xf32>
    %73 = vector.extract_strided_slice %0 {offsets = [3, 0, 0], sizes = [1, 8, 128], strides = [1, 1, 1]} : vector<5x8x128xf32> to vector<1x8x128xf32>
    %74 = vector.shape_cast %73 : vector<1x8x128xf32> to vector<8x128xf32>
    %75 = vector.extract_strided_slice %0 {offsets = [3, 0, 0], sizes = [1, 8, 128], strides = [1, 1, 1]} : vector<5x8x128xf32> to vector<1x8x128xf32>
    %76 = vector.shape_cast %75 : vector<1x8x128xf32> to vector<8x128xf32>
    %77 = arith.mulf %74, %76 : vector<8x128xf32>
    %78 = vector.extract_strided_slice %0 {offsets = [4, 0, 0], sizes = [1, 8, 128], strides = [1, 1, 1]} : vector<5x8x128xf32> to vector<1x8x128xf32>
    %79 = vector.shape_cast %78 : vector<1x8x128xf32> to vector<8x128xf32>
    %80 = vector.extract_strided_slice %0 {offsets = [4, 0, 0], sizes = [1, 8, 128], strides = [1, 1, 1]} : vector<5x8x128xf32> to vector<1x8x128xf32>
    %81 = vector.shape_cast %80 : vector<1x8x128xf32> to vector<8x128xf32>
    %82 = arith.mulf %79, %81 : vector<8x128xf32>
    %83 = arith.addf %77, %82 : vector<8x128xf32>
    %cst_7 = arith.constant 5.000000e-02 : f32
    %84 = vector.broadcast %cst_7 : f32 to vector<8x128xf32>
    %85 = arith.mulf %84, %83 : vector<8x128xf32>
    %86 = arith.addf %72, %85 : vector<8x128xf32>
    %c0_8 = arith.constant 0 : index
    %c0_9 = arith.constant 0 : index
    %87 = vector.load %arg2[%c0_8, %c0_9] : memref<8x128xf32, #tpu.memory_space<vmem>>, vector<8x128xf32>
    tpu.vector_store %arg2[%c0_8, %c0_9], %86 {strides = array<i32>} : memref<8x128xf32, #tpu.memory_space<vmem>>, vector<8x128xf32>,
    return
  }
  func.func @transform_0(%arg0: i32) -> (i32, i32, i32) {
    %c0_i32 = arith.constant 0 : i32
    %c0_i32_0 = arith.constant 0 : i32
    %c0_i32_1 = arith.constant 0 : i32
    return %c0_i32, %arg0, %c0_i32_0 : i32, i32, i32
  }
  func.func @transform_1(%arg0: i32) -> (i32, i32) {
    %c0_i32 = arith.constant 0 : i32
    %c0_i32_0 = arith.constant 0 : i32
    return %arg0, %c0_i32 : i32, i32
  }
}

</mosaic_0001>

<llo_original>
// kernel: tpu_custom_call.1
$region0: #{tpu_custom_call.1}
  #allocation0 [shape = 'u32[]', space=smem, size = 0x4, offset = 0x4, fixed_abs, tag = 'smem constant byte address 0x4 - core index']
  #allocation1 [shape = 'u32[72,128]{1,0:T(1,128)}', space=vmem, size = 0x9000, scoped, tag = 'internal scratch']
  %s0 = inlined_call_operand.hbm [shape: f32[5,16,128], index: 0, kind: input, shape index: {}]
  %s1 = inlined_call_operand.hbm [shape: f32[16,128], index: 1, kind: output, shape index: {}]
  %s2 = sld [smem:[#allocation0]]
  $region41: #{tpu_custom_call.1} parent=0
    _
  %s4 = ssub.s32 1, %s2
  %s5 = scalar_select 0, %s4, %s2
  $region1: #{tpu_custom_call.1} parent=0
    #allocation2 [shape = 'u8[40960]{0}', space=vmem, size = 0xa000, scoped, tag = 'input window, operand 0']
    #allocation3 [shape = 's32[2]{0}', space=sflag, size = 0x8, scoped, tag = 'scoped memory for tpu_custom_call.1']
    #allocation4 [shape = 's32[2]{0}', space=sflag, size = 0x8, scoped, tag = 'scoped memory for tpu_custom_call.1']
    #allocation5 [shape = 'u8[8192]{0}', space=vmem, size = 0x2000, scoped, tag = 'output window, operand 0']
    %6 = vsyncpa [#allocation3], 0
    %s7 = scalar_lea.sflag [#allocation3], 1
    %8 = vsyncpa %s7, 0
    %9 = vsyncpa [#allocation4], 0
    %s10 = scalar_lea.sflag [#allocation4], 1
    %11 = vsyncpa %s10, 0
    loop: start=0, step=1, limit=4
    $region2: #{tpu_custom_call.1} parent=1 // loop_pre_header
      _
    $region3: #{tpu_custom_call.1} parent=1 // loop_header
      %s13 = sphi 0, %s17
      %p14 = scmp.ge.s32.totalorder %s13, 4
      %s23 = sphi 0, %s25
      %s26 = sphi 0, %s23
      %s27 = sphi 0, %s26
      %s43 = sphi 0, %s27
      %s49 = sphi 0, %s51
      %s52 = sphi 0, %s49
      %s53 = sphi 0, %s52
      %s69 = sphi 0, %s53
    $region4: #{tpu_custom_call.1} parent=1 // loop_header_branch
      %16 = sbr.rel (%p14) target = $region8
    $region5: #{tpu_custom_call.1} parent=1 // loop_body
      %s18 = ssub.s32 %s13, 1
      %s19 = ssub.s32 %s13, 2
      %s20 = sadd.s32 %s13, 1
      %s21 = ssub.s32 %s13, %s20
      %p22 = scmp.eq.s32.totalorder %s21, 0
      %s24 = sadd.s32 %s23, 1
      %s25 = scalar_select %p22, %s23, %s24
      %p28 = pneg %p22
      %p29 = scmp.eq.s32.totalorder %s13, 1
      %p30 = por %p28, %p29
      %p31 = scmp.ne.s32.totalorder %s23, %s26
      %p32 = scmp.eq.s32.totalorder %s13, 0
      %p33 = por %p31, %p32
      %p34 = scmp.ne.s32.totalorder %s23, %s26
      %p35 = scmp.eq.s32.totalorder %s18, 1
      %p36 = por %p34, %p35
      %p37 = scmp.ne.s32.totalorder %s26, %s27
      %p38 = scmp.eq.s32.totalorder %s18, 0
      %p39 = por %p37, %p38
      %p40 = scmp.ne.s32.totalorder %s26, %s27
      %p41 = scmp.eq.s32.totalorder %s19, 1
      %p42 = por %p40, %p41
      %p44 = scmp.ne.s32.totalorder %s27, %s43
      %p45 = scmp.eq.s32.totalorder %s19, 0
      %p46 = por %p44, %p45
      %s47 = ssub.s32 %s13, %s20
      %p48 = scmp.eq.s32.totalorder %s47, 0
      %s50 = sadd.s32 %s49, 1
      %s51 = scalar_select %p48, %s49, %s50
      %p54 = pneg %p48
      %p55 = scmp.eq.s32.totalorder %s13, 1
      %p56 = por %p54, %p55
      %p57 = scmp.ne.s32.totalorder %s49, %s52
      %p58 = scmp.eq.s32.totalorder %s13, 0
      %p59 = por %p57, %p58
      %p60 = scmp.ne.s32.totalorder %s49, %s52
      %p61 = scmp.eq.s32.totalorder %s18, 1
      %p62 = por %p60, %p61
      %p63 = scmp.ne.s32.totalorder %s52, %s53
      %p64 = scmp.eq.s32.totalorder %s18, 0
      %p65 = por %p63, %p64
      %p66 = scmp.ne.s32.totalorder %s52, %s53
      %p67 = scmp.eq.s32.totalorder %s19, 1
      %p68 = por %p66, %p67
      %p70 = scmp.ne.s32.totalorder %s53, %s69
      %p71 = scmp.eq.s32.totalorder %s19, 0
      %p72 = por %p70, %p71
      %p73 = scmp.le.s32.totalorder 1, %s13
      %p74 = scmp.lt.s32.totalorder %s13, 3
      %p75 = pnand %p73, %p74
      %p76 = pneg %p75
      // Predicated region
      $region9: #{tpu_custom_call.1} parent=5 // pred_check
        _
      $region10: #{tpu_custom_call.1} parent=5 // pred_check_branch
        %78 = sbr.rel (%p75) target = $region12
      $region11: #{tpu_custom_call.1} parent=5 // pred_region
        %s79 = ssub.s32 %s13, 1
      $region12: #{tpu_custom_call.1} parent=5 // pred_fallthru
        _
      %p80 = scmp.lt.s32.totalorder %s13, 2
      // Predicated region
      $region13: #{tpu_custom_call.1} parent=5 // pred_check
        %p81 = pneg %p80
      $region14: #{tpu_custom_call.1} parent=5 // pred_check_branch
        %83 = sbr.rel (%p81) target = $region16
      $region15: #{tpu_custom_call.1} parent=5 // pred_region
        // Predicated region
        $region17: #{tpu_custom_call.1} parent=15 // pred_check
          %p84 = pneg %p33
        $region18: #{tpu_custom_call.1} parent=15 // pred_check_branch
          %86 = sbr.rel (%p84) target = $region20
        $region19: #{tpu_custom_call.1} parent=15 // pred_region
          %s87 = sand.u32 %s23, 1
          %s88 = scalar_lea.sflag [#allocation3], %s87
          %s89 = sand.u32 %s23, 1
          %s90 = smul.addr %s89, 40
          %s91 = scalar_lea.vmem [#allocation2], %s90
          %93 = vsyncadd %s88, 0
          %s94 = smul.addr %s13, 8
          %s95 = scalar_lea.hbm %s0, %s94
          %s96 = sshll.u32 %s95, 4
          %s97 = int_to_ptr.hbm [resolvable:$true] %s96
          %s98 = sshll.u32 %s91, 4
          %s99 = int_to_ptr.vmem [resolvable:$true] %s98
          %104 = dma.hbm_to_vmem [thread:$0]  %s97, 640, %s99, %s88, 256, 128, 8
        $region20: #{tpu_custom_call.1} parent=15 // pred_fallthru
          _
      $region16: #{tpu_custom_call.1} parent=5 // pred_fallthru
        _
      %p105 = scmp.le.s32.totalorder 1, %s13
      %p106 = scmp.lt.s32.totalorder %s13, 3
      %p107 = pnand %p105, %p106
      %p108 = pneg %p107
      // Predicated region
      $region21: #{tpu_custom_call.1} parent=5 // pred_check
        _
      $region22: #{tpu_custom_call.1} parent=5 // pred_check_branch
        %110 = sbr.rel (%p107) target = $region24
      $region23: #{tpu_custom_call.1} parent=5 // pred_region
        %s111 = ssub.s32 %s13, 1
        %s112 = sand.u32 %s26, 1
        %s113 = scalar_lea.sflag [#allocation3], %s112
        %s114 = sand.u32 %s26, 1
        %s115 = smul.addr %s114, 40
        %s116 = scalar_lea.vmem [#allocation2], %s115
        // Predicated region
        $region25: #{tpu_custom_call.1} parent=23 // pred_check
          %p117 = pneg %p39
        $region26: #{tpu_custom_call.1} parent=23 // pred_check_branch
          %119 = sbr.rel (%p117) target = $region28
        $region27: #{tpu_custom_call.1} parent=23 // pred_region
          %121 = dma.done %s113, 640
        $region28: #{tpu_custom_call.1} parent=23 // pred_fallthru
          _
        %s122 = sand.u32 %s26, 1
        %s123 = scalar_lea.sflag [#allocation3], %s122
        %s124 = sand.u32 %s26, 1
        %s125 = smul.addr %s124, 40
        %s126 = scalar_lea.vmem [#allocation2], %s125
        %p127 = pneg %p39
        %p128 = pneg %p36
        %p129 = pneg %p65
        %p130 = pneg %p62
        %s131 = sand.u32 %s52, 1
        %s132 = scalar_lea.sflag [#allocation4], %s131
        %s133 = sand.u32 %s52, 1
        %s134 = smul.addr %s133, 8
        %s135 = scalar_lea.vmem [#allocation5], %s134
        %v136 = vld [vmem:[%s116] sm:$0xff]
        %v137 = vld [vmem:[%s116 + $0x8] sm:$0xff]
        %v138 = vld [vmem:[%s116 + $0x10] sm:$0xff]
        %v139 = vld [vmem:[%s116 + $0x18] sm:$0xff]
        %v140 = vld [vmem:[%s116 + $0x20] sm:$0xff]
        %v141 = vmul.f32 %v136, 4.0
        %v142 = vmul.f32 %v137, 4.0
        %v143 = vmul.f32 %v138, 4.0
        %v144 = vmul.f32 %v139, 4.0
        %v145 = vmul.f32 %v140, 4.0
        %v146 = vand.u32 2147483647, %v141
        %vm147 = vcmp.le.f32.partialorder %v146, 0.7853982
        %vm148 = vcmp.lt.s32.totalorder %v141, 0
        %v149 = vand.u32 %v141, 2139095040
        %v150 = vshrl.u32 %v149, 23
        %v151 = vsub.s32 %v150, 127
        %v152 = vand.u32 2147483647, %v141
        %v153 = vand.u32 %v152, 8388607
        %v154 = vor.u32 %v153, 8388608
        %v155 = vsub.s32 0, %v154
        %v156 = vadd.s32 %v151, 1
        %vm157 = vcmp.gt.s32.totalorder %v156, 0
        %v158 = vsel %vm157, %v156, 0
        %v159 = vshrl.u32 %v158, 5
        %v160 = vand.u32 %v158, 31
        %v161 = vsub.s32 32, %v160
        %v162 = vshrl.u32 683565275, %v161
        %v163 = vshll.u32 683565275, %v160
        %v164 = vshrl.u32 2475754826, %v161
        %v165 = vor.u32 %v163, %v164
        %v166 = vshll.u32 2475754826, %v160
        %v167 = vshrl.u32 2131351028, %v161
        %v168 = vor.u32 %v166, %v167
        %v169 = vshll.u32 2131351028, %v160
        %v170 = vshrl.u32 2102212464, %v161
        %v171 = vor.u32 %v169, %v170
        %v172 = vshll.u32 2102212464, %v160
        %v173 = vshrl.u32 920167782, %v161
        %v174 = vor.u32 %v172, %v173
        %v175 = vshll.u32 920167782, %v160
        %v176 = vshrl.u32 1326507024, %v161
        %v177 = vor.u32 %v175, %v176
        %vm178 = vcmp.lt.s32.totalorder %v159, 1
        %vm179 = vcmp.lt.s32.totalorder %v159, 2
        %vm180 = vcmp.lt.s32.totalorder %v159, 3
        %vm181 = vcmp.lt.s32.totalorder %v159, 4
        %v182 = vsel %vm178, %v162, %v165
        %v183 = vsel %vm181, %v171, 2102212464
        %v184 = vsel %vm180, %v168, %v183
        %v185 = vsel %vm179, %v182, %v184
        %v186 = vsel %vm178, %v165, %v168
        %v187 = vsel %vm181, %v174, 920167782
        %v188 = vsel %vm180, %v171, %v187
        %v189 = vsel %vm179, %v186, %v188
        %v190 = vsel %vm178, %v168, %v171
        %v191 = vsel %vm181, %v177, 1326507024
        %v192 = vsel %vm180, %v174, %v191
        %v193 = vsel %vm179, %v190, %v192
        %v194 = vshll.u32 %v154, 8
        %v195 = vand.u32 %v194, 65535
        %v196 = vshrl.u32 %v194, 16
        %v197 = vand.u32 %v193, 65535
        %v198 = vshrl.u32 %v193, 16
        %v199 = vmul.u32 %v195, %v197
        %v200 = vmul.u32 %v195, %v198
        %v201 = vmul.u32 %v196, %v197
        %v202 = vmul.u32 %v196, %v198
        %v203 = vshll.u32 %v200, 16
        %v204 = vshrl.u32 %v200, 16
        %v205 = vshll.u32 %v201, 16
        %v206 = vshrl.u32 %v201, 16
        %vm207 = vc.u32 %v199, %v203
        %v208 = vsel %vm207, 1, 0
        %v209 = vadd.s32 %v199, %v203
        %v210 = vadd.s32 %v202, %v208
        %vm211 = vc.u32 %v209, %v205
        %v212 = vsel %vm211, 1, 0
        %v213 = vadd.s32 %v209, %v205
        %v214 = vadd.s32 %v210, %v212
        %v215 = vadd.s32 %v214, %v204
        %v216 = vadd.s32 %v215, %v206
        %v217 = vand.u32 %v194, 65535
        %v218 = vshrl.u32 %v194, 16
        %v219 = vand.u32 %v189, 65535
        %v220 = vshrl.u32 %v189, 16
        %v221 = vmul.u32 %v217, %v219
        %v222 = vmul.u32 %v217, %v220
        %v223 = vmul.u32 %v218, %v219
        %v224 = vmul.u32 %v218, %v220
        %v225 = vshll.u32 %v222, 16
        %v226 = vshrl.u32 %v222, 16
        %v227 = vshll.u32 %v223, 16
        %v228 = vshrl.u32 %v223, 16
        %vm229 = vc.u32 %v221, %v225
        %v230 = vsel %vm229, 1, 0
        %v231 = vadd.s32 %v221, %v225
        %v232 = vadd.s32 %v224, %v230
        %vm233 = vc.u32 %v231, %v227
        %v234 = vsel %vm233, 1, 0
        %v235 = vadd.s32 %v231, %v227
        %v236 = vadd.s32 %v232, %v234
        %v237 = vadd.s32 %v236, %v226
        %v238 = vadd.s32 %v237, %v228
        %v239 = vmul.u32 %v194, %v185
        %v240 = vadd.s32 %v216, %v235
        %vm241 = vc.u32 %v216, %v235
        %v242 = vadd.s32 %v238, 1
        %v243 = vsel %vm241, %v242, %v238
        %v244 = vadd.s32 %v239, %v243
        %v245 = vadd.s32 %v244, 536870912
        %v246 = vshrl.u32 %v245, 30
        %v247 = vshll.u32 %v246, 30
        %v248 = vsub.s32 %v244, %v247
        %vm249 = vcmp.lt.s32.totalorder %v248, 0
        %v250 = vsub.s32 0, %v248
        %v251 = vsel %vm249, %v250, %v248
        %v252 = vclz %v251
        %v253 = vsub.s32 %v252, 2
        %vm254 = vcmp.gt.s32.totalorder 0, %v253
        %v255 = vsel %vm254, 0, %v253
        %v256 = vsub.s32 32, %v255
        %v257 = vshll.u32 %v248, %v255
        %v258 = vshrl.u32 %v240, %v256
        %v259 = vor.u32 %v257, %v258
        %v260 = vsub.s32 4294967266, %v255
        %v261 = vadd.s32 %v260, 127
        %v262 = vshll.u32 %v261, 23
        %v263 = vor.u32 4788187, %v262
        %v264 = vand.u32 2147483647, %v263
        %v266 = vcvt.s32.f32 %v259
        %v267 = vmul.f32 %v266, %v264
        %v268 = vxor.u32 %v267, 2147483648
        %v269 = vsel %vm148, %v268, %v267
        %v270 = vsub.s32 4, %v246
        %v271 = vsel %vm148, %v270, %v246
        %v272 = vsel %vm147, %v141, %v269
        %v273 = vsel %vm147, 0, %v271
        %v274 = vmul.f32 %v272, %v272
        %v275 = vmul.f32 %v274, -0.001358992
        %v276 = vadd.f32 %v275, 0.041655596
        %v277 = vmul.f32 %v274, %v276
        %v278 = vadd.f32 %v277, -0.4999988
        %v279 = vmul.f32 %v274, %v278
        %v280 = vadd.f32 1.0, %v279
        %v281 = vmul.f32 %v272, %v272
        %v282 = vmul.f32 %v281, -0.00019511016
        %v283 = vadd.f32 %v282, 0.008332121
        %v284 = vmul.f32 %v281, %v283
        %v285 = vadd.f32 %v284, -0.16666654
        %v286 = vmul.f32 %v281, %v285
        %v287 = vadd.f32 %v286, 1.0
        %v288 = vmul.f32 %v287, %v272
        %vm289 = vweird.f32 %v141
        %v290 = vand.u32 %v273, 3
        %vm291 = vcmp.lt.s32.totalorder %v290, 2
        %vm292 = vcmp.eq.s32.totalorder %v290, 0
        %v293 = vxor.u32 %v288, 2147483648
        %v294 = vsel %vm292, %v280, %v293
        %vm295 = vcmp.eq.s32.totalorder %v290, 2
        %v296 = vxor.u32 %v280, 2147483648
        %v297 = vsel %vm295, %v296, %v288
        %v298 = vsel %vm291, %v294, %v297
        %v299 = vsel %vm289, nan, %v298
        %v300 = vand.u32 2147483647, %v142
        %vm301 = vcmp.le.f32.partialorder %v300, 0.7853982
        %vm302 = vcmp.lt.s32.totalorder %v142, 0
        %v303 = vand.u32 %v142, 2139095040
        %v304 = vshrl.u32 %v303, 23
        %v305 = vsub.s32 %v304, 127
        %v306 = vand.u32 2147483647, %v142
        %v307 = vand.u32 %v306, 8388607
        %v308 = vor.u32 %v307, 8388608
        %v309 = vsub.s32 0, %v308
        %v310 = vadd.s32 %v305, 1
        %vm311 = vcmp.gt.s32.totalorder %v310, 0
        %v312 = vsel %vm311, %v310, 0
        %v313 = vshrl.u32 %v312, 5
        %v314 = vand.u32 %v312, 31
        %v315 = vsub.s32 32, %v314
        %v316 = vshrl.u32 683565275, %v315
        %v317 = vshll.u32 683565275, %v314
        %v318 = vshrl.u32 2475754826, %v315
        %v319 = vor.u32 %v317, %v318
        %v320 = vshll.u32 2475754826, %v314
        %v321 = vshrl.u32 2131351028, %v315
        %v322 = vor.u32 %v320, %v321
        %v323 = vshll.u32 2131351028, %v314
        %v324 = vshrl.u32 2102212464, %v315
        %v325 = vor.u32 %v323, %v324
        %v326 = vshll.u32 2102212464, %v314
        %v327 = vshrl.u32 920167782, %v315
        %v328 = vor.u32 %v326, %v327
        %v329 = vshll.u32 920167782, %v314
        %v330 = vshrl.u32 1326507024, %v315
        %v331 = vor.u32 %v329, %v330
        %vm332 = vcmp.lt.s32.totalorder %v313, 1
        %vm333 = vcmp.lt.s32.totalorder %v313, 2
        %vm334 = vcmp.lt.s32.totalorder %v313, 3
        %vm335 = vcmp.lt.s32.totalorder %v313, 4
        %v336 = vsel %vm332, %v316, %v319
        %v337 = vsel %vm335, %v325, 2102212464
        %v338 = vsel %vm334, %v322, %v337
        %v339 = vsel %vm333, %v336, %v338
        %v340 = vsel %vm332, %v319, %v322
        %v341 = vsel %vm335, %v328, 920167782
        %v342 = vsel %vm334, %v325, %v341
        %v343 = vsel %vm333, %v340, %v342
        %v344 = vsel %vm332, %v322, %v325
        %v345 = vsel %vm335, %v331, 1326507024
        %v346 = vsel %vm334, %v328, %v345
        %v347 = vsel %vm333, %v344, %v346
        %v348 = vshll.u32 %v308, 8
        %v349 = vand.u32 %v348, 65535
        %v350 = vshrl.u32 %v348, 16
        %v351 = vand.u32 %v347, 65535
        %v352 = vshrl.u32 %v347, 16
        %v353 = vmul.u32 %v349, %v351
        %v354 = vmul.u32 %v349, %v352
        %v355 = vmul.u32 %v350, %v351
        %v356 = vmul.u32 %v350, %v352
        %v357 = vshll.u32 %v354, 16
        %v358 = vshrl.u32 %v354, 16
        %v359 = vshll.u32 %v355, 16
        %v360 = vshrl.u32 %v355, 16
        %vm361 = vc.u32 %v353, %v357
        %v362 = vsel %vm361, 1, 0
        %v363 = vadd.s32 %v353, %v357
        %v364 = vadd.s32 %v356, %v362
        %vm365 = vc.u32 %v363, %v359
        %v366 = vsel %vm365, 1, 0
        %v367 = vadd.s32 %v363, %v359
        %v368 = vadd.s32 %v364, %v366
        %v369 = vadd.s32 %v368, %v358
        %v370 = vadd.s32 %v369, %v360
        %v371 = vand.u32 %v348, 65535
        %v372 = vshrl.u32 %v348, 16
        %v373 = vand.u32 %v343, 65535
        %v374 = vshrl.u32 %v343, 16
        %v375 = vmul.u32 %v371, %v373
        %v376 = vmul.u32 %v371, %v374
        %v377 = vmul.u32 %v372, %v373
        %v378 = vmul.u32 %v372, %v374
        %v379 = vshll.u32 %v376, 16
        %v380 = vshrl.u32 %v376, 16
        %v381 = vshll.u32 %v377, 16
        %v382 = vshrl.u32 %v377, 16
        %vm383 = vc.u32 %v375, %v379
        %v384 = vsel %vm383, 1, 0
        %v385 = vadd.s32 %v375, %v379
        %v386 = vadd.s32 %v378, %v384
        %vm387 = vc.u32 %v385, %v381
        %v388 = vsel %vm387, 1, 0
        %v389 = vadd.s32 %v385, %v381
        %v390 = vadd.s32 %v386, %v388
        %v391 = vadd.s32 %v390, %v380
        %v392 = vadd.s32 %v391, %v382
        %v393 = vmul.u32 %v348, %v339
        %v394 = vadd.s32 %v370, %v389
        %vm395 = vc.u32 %v370, %v389
        %v396 = vadd.s32 %v392, 1
        %v397 = vsel %vm395, %v396, %v392
        %v398 = vadd.s32 %v393, %v397
        %v399 = vadd.s32 %v398, 536870912
        %v400 = vshrl.u32 %v399, 30
        %v401 = vshll.u32 %v400, 30
        %v402 = vsub.s32 %v398, %v401
        %vm403 = vcmp.lt.s32.totalorder %v402, 0
        %v404 = vsub.s32 0, %v402
        %v405 = vsel %vm403, %v404, %v402
        %v406 = vclz %v405
        %v407 = vsub.s32 %v406, 2
        %vm408 = vcmp.gt.s32.totalorder 0, %v407
        %v409 = vsel %vm408, 0, %v407
        %v410 = vsub.s32 32, %v409
        %v411 = vshll.u32 %v402, %v409
        %v412 = vshrl.u32 %v394, %v410
        %v413 = vor.u32 %v411, %v412
        %v414 = vsub.s32 4294967266, %v409
        %v415 = vadd.s32 %v414, 127
        %v416 = vshll.u32 %v415, 23
        %v417 = vor.u32 4788187, %v416
        %v418 = vand.u32 2147483647, %v417
        %v420 = vcvt.s32.f32 %v413
        %v421 = vmul.f32 %v420, %v418
        %v422 = vxor.u32 %v421, 2147483648
        %v423 = vsel %vm302, %v422, %v421
        %v424 = vsub.s32 4, %v400
        %v425 = vsel %vm302, %v424, %v400
        %v426 = vsel %vm301, %v142, %v423
        %v427 = vsel %vm301, 0, %v425
        %v428 = vmul.f32 %v426, %v426
        %v429 = vmul.f32 %v428, -0.001358992
        %v430 = vadd.f32 %v429, 0.041655596
        %v431 = vmul.f32 %v428, %v430
        %v432 = vadd.f32 %v431, -0.4999988
        %v433 = vmul.f32 %v428, %v432
        %v434 = vadd.f32 1.0, %v433
        %v435 = vmul.f32 %v426, %v426
        %v436 = vmul.f32 %v435, -0.00019511016
        %v437 = vadd.f32 %v436, 0.008332121
        %v438 = vmul.f32 %v435, %v437
        %v439 = vadd.f32 %v438, -0.16666654
        %v440 = vmul.f32 %v435, %v439
        %v441 = vadd.f32 %v440, 1.0
        %v442 = vmul.f32 %v441, %v426
        %vm443 = vweird.f32 %v142
        %v444 = vand.u32 %v427, 3
        %vm445 = vcmp.lt.s32.totalorder %v444, 2
        %vm446 = vcmp.eq.s32.totalorder %v444, 0
        %v447 = vxor.u32 %v442, 2147483648
        %v448 = vsel %vm446, %v434, %v447
        %vm449 = vcmp.eq.s32.totalorder %v444, 2
        %v450 = vxor.u32 %v434, 2147483648
        %v451 = vsel %vm449, %v450, %v442
        %v452 = vsel %vm445, %v448, %v451
        %v453 = vsel %vm443, nan, %v452
        %v454 = vand.u32 2147483647, %v143
        %vm455 = vcmp.le.f32.partialorder %v454, 0.7853982
        %vm456 = vcmp.lt.s32.totalorder %v143, 0
        %v457 = vand.u32 %v143, 2139095040
        %v458 = vshrl.u32 %v457, 23
        %v459 = vsub.s32 %v458, 127
        %v460 = vand.u32 2147483647, %v143
        %v461 = vand.u32 %v460, 8388607
        %v462 = vor.u32 %v461, 8388608
        %v463 = vsub.s32 0, %v462
        %v464 = vadd.s32 %v459, 1
        %vm465 = vcmp.gt.s32.totalorder %v464, 0
        %v466 = vsel %vm465, %v464, 0
        %v467 = vshrl.u32 %v466, 5
        %v468 = vand.u32 %v466, 31
        %v469 = vsub.s32 32, %v468
        %v470 = vshrl.u32 683565275, %v469
        %v471 = vshll.u32 683565275, %v468
        %v472 = vshrl.u32 2475754826, %v469
        %v473 = vor.u32 %v471, %v472
        %v474 = vshll.u32 2475754826, %v468
        %v475 = vshrl.u32 2131351028, %v469
        %v476 = vor.u32 %v474, %v475
        %v477 = vshll.u32 2131351028, %v468
        %v478 = vshrl.u32 2102212464, %v469
        %v479 = vor.u32 %v477, %v478
        %v480 = vshll.u32 2102212464, %v468
        %v481 = vshrl.u32 920167782, %v469
        %v482 = vor.u32 %v480, %v481
        %v483 = vshll.u32 920167782, %v468
        %v484 = vshrl.u32 1326507024, %v469
        %v485 = vor.u32 %v483, %v484
        %vm486 = vcmp.lt.s32.totalorder %v467, 1
        %vm487 = vcmp.lt.s32.totalorder %v467, 2
        %vm488 = vcmp.lt.s32.totalorder %v467, 3
        %vm489 = vcmp.lt.s32.totalorder %v467, 4
        %v490 = vsel %vm486, %v470, %v473
        %v491 = vsel %vm489, %v479, 2102212464
        %v492 = vsel %vm488, %v476, %v491
        %v493 = vsel %vm487, %v490, %v492
        %v494 = vsel %vm486, %v473, %v476
        %v495 = vsel %vm489, %v482, 920167782
        %v496 = vsel %vm488, %v479, %v495
        %v497 = vsel %vm487, %v494, %v496
        %v498 = vsel %vm486, %v476, %v479
        %v499 = vsel %vm489, %v485, 1326507024
        %v500 = vsel %vm488, %v482, %v499
        %v501 = vsel %vm487, %v498, %v500
        %v502 = vshll.u32 %v462, 8
        %v503 = vand.u32 %v502, 65535
        %v504 = vshrl.u32 %v502, 16
        %v505 = vand.u32 %v501, 65535
        %v506 = vshrl.u32 %v501, 16
        %v507 = vmul.u32 %v503, %v505
        %v508 = vmul.u32 %v503, %v506
        %v509 = vmul.u32 %v504, %v505
        %v510 = vmul.u32 %v504, %v506
        %v511 = vshll.u32 %v508, 16
        %v512 = vshrl.u32 %v508, 16
        %v513 = vshll.u32 %v509, 16
        %v514 = vshrl.u32 %v509, 16
        %vm515 = vc.u32 %v507, %v511
        %v516 = vsel %vm515, 1, 0
        %v517 = vadd.s32 %v507, %v511
        %v518 = vadd.s32 %v510, %v516
        %vm519 = vc.u32 %v517, %v513
        %v520 = vsel %vm519, 1, 0
        %v521 = vadd.s32 %v517, %v513
        %v522 = vadd.s32 %v518, %v520
        %v523 = vadd.s32 %v522, %v512
        %v524 = vadd.s32 %v523, %v514
        %v525 = vand.u32 %v502, 65535
        %v526 = vshrl.u32 %v502, 16
        %v527 = vand.u32 %v497, 65535
        %v528 = vshrl.u32 %v497, 16
        %v529 = vmul.u32 %v525, %v527
        %v530 = vmul.u32 %v525, %v528
        %v531 = vmul.u32 %v526, %v527
        %v532 = vmul.u32 %v526, %v528
        %v533 = vshll.u32 %v530, 16
        %v534 = vshrl.u32 %v530, 16
        %v535 = vshll.u32 %v531, 16
        %v536 = vshrl.u32 %v531, 16
        %vm537 = vc.u32 %v529, %v533
        %v538 = vsel %vm537, 1, 0
        %v539 = vadd.s32 %v529, %v533
        %v540 = vadd.s32 %v532, %v538
        %vm541 = vc.u32 %v539, %v535
        %v542 = vsel %vm541, 1, 0
        %v543 = vadd.s32 %v539, %v535
        %v544 = vadd.s32 %v540, %v542
        %v545 = vadd.s32 %v544, %v534
        %v546 = vadd.s32 %v545, %v536
        %v547 = vmul.u32 %v502, %v493
        %v548 = vadd.s32 %v524, %v543
        %vm549 = vc.u32 %v524, %v543
        %v550 = vadd.s32 %v546, 1
        %v551 = vsel %vm549, %v550, %v546
        %v552 = vadd.s32 %v547, %v551
        %v553 = vadd.s32 %v552, 536870912
        %v554 = vshrl.u32 %v553, 30
        %v555 = vshll.u32 %v554, 30
        %v556 = vsub.s32 %v552, %v555
        %vm557 = vcmp.lt.s32.totalorder %v556, 0
        %v558 = vsub.s32 0, %v556
        %v559 = vsel %vm557, %v558, %v556
        %v560 = vclz %v559
        %v561 = vsub.s32 %v560, 2
        %vm562 = vcmp.gt.s32.totalorder 0, %v561
        %v563 = vsel %vm562, 0, %v561
        %v564 = vsub.s32 32, %v563
        %v565 = vshll.u32 %v556, %v563
        %v566 = vshrl.u32 %v548, %v564
        %v567 = vor.u32 %v565, %v566
        %v568 = vsub.s32 4294967266, %v563
        %v569 = vadd.s32 %v568, 127
        %v570 = vshll.u32 %v569, 23
        %v571 = vor.u32 4788187, %v570
        %v572 = vand.u32 2147483647, %v571
        %v574 = vcvt.s32.f32 %v567
        %v575 = vmul.f32 %v574, %v572
        %v576 = vxor.u32 %v575, 2147483648
        %v577 = vsel %vm456, %v576, %v575
        %v578 = vsub.s32 4, %v554
        %v579 = vsel %vm456, %v578, %v554
        %v580 = vsel %vm455, %v143, %v577
        %v581 = vsel %vm455, 0, %v579
        %v582 = vmul.f32 %v580, %v580
        %v583 = vmul.f32 %v582, -0.001358992
        %v584 = vadd.f32 %v583, 0.041655596
        %v585 = vmul.f32 %v582, %v584
        %v586 = vadd.f32 %v585, -0.4999988
        %v587 = vmul.f32 %v582, %v586
        %v588 = vadd.f32 1.0, %v587
        %v589 = vmul.f32 %v580, %v580
        %v590 = vmul.f32 %v589, -0.00019511016
        %v591 = vadd.f32 %v590, 0.008332121
        %v592 = vmul.f32 %v589, %v591
        %v593 = vadd.f32 %v592, -0.16666654
        %v594 = vmul.f32 %v589, %v593
        %v595 = vadd.f32 %v594, 1.0
        %v596 = vmul.f32 %v595, %v580
        %vm597 = vweird.f32 %v143
        %v598 = vand.u32 %v581, 3
        %vm599 = vcmp.lt.s32.totalorder %v598, 2
        %vm600 = vcmp.eq.s32.totalorder %v598, 0
        %v601 = vxor.u32 %v596, 2147483648
        %v602 = vsel %vm600, %v588, %v601
        %vm603 = vcmp.eq.s32.totalorder %v598, 2
        %v604 = vxor.u32 %v588, 2147483648
        %v605 = vsel %vm603, %v604, %v596
        %v606 = vsel %vm599, %v602, %v605
        %v607 = vsel %vm597, nan, %v606
        %v608 = vand.u32 2147483647, %v144
        %vm609 = vcmp.le.f32.partialorder %v608, 0.7853982
        %vm610 = vcmp.lt.s32.totalorder %v144, 0
        %v611 = vand.u32 %v144, 2139095040
        %v612 = vshrl.u32 %v611, 23
        %v613 = vsub.s32 %v612, 127
        %v614 = vand.u32 2147483647, %v144
        %v615 = vand.u32 %v614, 8388607
        %v616 = vor.u32 %v615, 8388608
        %v617 = vsub.s32 0, %v616
        %v618 = vadd.s32 %v613, 1
        %vm619 = vcmp.gt.s32.totalorder %v618, 0
        %v620 = vsel %vm619, %v618, 0
        %v621 = vshrl.u32 %v620, 5
        %v622 = vand.u32 %v620, 31
        %v623 = vsub.s32 32, %v622
        %v624 = vshrl.u32 683565275, %v623
        %v625 = vshll.u32 683565275, %v622
        %v626 = vshrl.u32 2475754826, %v623
        %v627 = vor.u32 %v625, %v626
        %v628 = vshll.u32 2475754826, %v622
        %v629 = vshrl.u32 2131351028, %v623
        %v630 = vor.u32 %v628, %v629
        %v631 = vshll.u32 2131351028, %v622
        %v632 = vshrl.u32 2102212464, %v623
        %v633 = vor.u32 %v631, %v632
        %v634 = vshll.u32 2102212464, %v622
        %v635 = vshrl.u32 920167782, %v623
        %v636 = vor.u32 %v634, %v635
        %v637 = vshll.u32 920167782, %v622
        %v638 = vshrl.u32 1326507024, %v623
        %v639 = vor.u32 %v637, %v638
        %vm640 = vcmp.lt.s32.totalorder %v621, 1
        %vm641 = vcmp.lt.s32.totalorder %v621, 2
        %vm642 = vcmp.lt.s32.totalorder %v621, 3
        %vm643 = vcmp.lt.s32.totalorder %v621, 4
        %v644 = vsel %vm640, %v624, %v627
        %v645 = vsel %vm643, %v633, 2102212464
        %v646 = vsel %vm642, %v630, %v645
        %v647 = vsel %vm641, %v644, %v646
        %v648 = vsel %vm640, %v627, %v630
        %v649 = vsel %vm643, %v636, 920167782
        %v650 = vsel %vm642, %v633, %v649
        %v651 = vsel %vm641, %v648, %v650
        %v652 = vsel %vm640, %v630, %v633
        %v653 = vsel %vm643, %v639, 1326507024
        %v654 = vsel %vm642, %v636, %v653
        %v655 = vsel %vm641, %v652, %v654
        %v656 = vshll.u32 %v616, 8
        %v657 = vand.u32 %v656, 65535
        %v658 = vshrl.u32 %v656, 16
        %v659 = vand.u32 %v655, 65535
        %v660 = vshrl.u32 %v655, 16
        %v661 = vmul.u32 %v657, %v659
        %v662 = vmul.u32 %v657, %v660
        %v663 = vmul.u32 %v658, %v659
        %v664 = vmul.u32 %v658, %v660
        %v665 = vshll.u32 %v662, 16
        %v666 = vshrl.u32 %v662, 16
        %v667 = vshll.u32 %v663, 16
        %v668 = vshrl.u32 %v663, 16
        %vm669 = vc.u32 %v661, %v665
        %v670 = vsel %vm669, 1, 0
        %v671 = vadd.s32 %v661, %v665
        %v672 = vadd.s32 %v664, %v670
        %vm673 = vc.u32 %v671, %v667
        %v674 = vsel %vm673, 1, 0
        %v675 = vadd.s32 %v671, %v667
        %v676 = vadd.s32 %v672, %v674
        %v677 = vadd.s32 %v676, %v666
        %v678 = vadd.s32 %v677, %v668
        %v679 = vand.u32 %v656, 65535
        %v680 = vshrl.u32 %v656, 16
        %v681 = vand.u32 %v651, 65535
        %v682 = vshrl.u32 %v651, 16
        %v683 = vmul.u32 %v679, %v681
        %v684 = vmul.u32 %v679, %v682
        %v685 = vmul.u32 %v680, %v681
        %v686 = vmul.u32 %v680, %v682
        %v687 = vshll.u32 %v684, 16
        %v688 = vshrl.u32 %v684, 16
        %v689 = vshll.u32 %v685, 16
        %v690 = vshrl.u32 %v685, 16
        %vm691 = vc.u32 %v683, %v687
        %v692 = vsel %vm691, 1, 0
        %v693 = vadd.s32 %v683, %v687
        %v694 = vadd.s32 %v686, %v692
        %vm695 = vc.u32 %v693, %v689
        %v696 = vsel %vm695, 1, 0
        %v697 = vadd.s32 %v693, %v689
        %v698 = vadd.s32 %v694, %v696
        %v699 = vadd.s32 %v698, %v688
        %v700 = vadd.s32 %v699, %v690
        %v701 = vmul.u32 %v656, %v647
        %v702 = vadd.s32 %v678, %v697
        %vm703 = vc.u32 %v678, %v697
        %v704 = vadd.s32 %v700, 1
        %v705 = vsel %vm703, %v704, %v700
        %v706 = vadd.s32 %v701, %v705
        %v707 = vadd.s32 %v706, 536870912
        %v708 = vshrl.u32 %v707, 30
        %v709 = vshll.u32 %v708, 30
        %v710 = vsub.s32 %v706, %v709
        %vm711 = vcmp.lt.s32.totalorder %v710, 0
        %v712 = vsub.s32 0, %v710
        %v713 = vsel %vm711, %v712, %v710
        %v714 = vclz %v713
        %v715 = vsub.s32 %v714, 2
        %vm716 = vcmp.gt.s32.totalorder 0, %v715
        %v717 = vsel %vm716, 0, %v715
        %v718 = vsub.s32 32, %v717
        %v719 = vshll.u32 %v710, %v717
        %v720 = vshrl.u32 %v702, %v718
        %v721 = vor.u32 %v719, %v720
        %v722 = vsub.s32 4294967266, %v717
        %v723 = vadd.s32 %v722, 127
        %v724 = vshll.u32 %v723, 23
        %v725 = vor.u32 4788187, %v724
        %v726 = vand.u32 2147483647, %v725
        %v728 = vcvt.s32.f32 %v721
        %v729 = vmul.f32 %v728, %v726
        %v730 = vxor.u32 %v729, 2147483648
        %v731 = vsel %vm610, %v730, %v729
        %v732 = vsub.s32 4, %v708
        %v733 = vsel %vm610, %v732, %v708
        %v734 = vsel %vm609, %v144, %v731
        %v735 = vsel %vm609, 0, %v733
        %v736 = vmul.f32 %v734, %v734
        %v737 = vmul.f32 %v736, -0.001358992
        %v738 = vadd.f32 %v737, 0.041655596
        %v739 = vmul.f32 %v736, %v738
        %v740 = vadd.f32 %v739, -0.4999988
        %v741 = vmul.f32 %v736, %v740
        %v742 = vadd.f32 1.0, %v741
        %v743 = vmul.f32 %v734, %v734
        %v744 = vmul.f32 %v743, -0.00019511016
        %v745 = vadd.f32 %v744, 0.008332121
        %v746 = vmul.f32 %v743, %v745
        %v747 = vadd.f32 %v746, -0.16666654
        %v748 = vmul.f32 %v743, %v747
        %v749 = vadd.f32 %v748, 1.0
        %v750 = vmul.f32 %v749, %v734
        %vm751 = vweird.f32 %v144
        %v752 = vand.u32 %v735, 3
        %vm753 = vcmp.lt.s32.totalorder %v752, 2
        %vm754 = vcmp.eq.s32.totalorder %v752, 0
        %v755 = vxor.u32 %v750, 2147483648
        %v756 = vsel %vm754, %v742, %v755
        %vm757 = vcmp.eq.s32.totalorder %v752, 2
        %v758 = vxor.u32 %v742, 2147483648
        %v759 = vsel %vm757, %v758, %v750
        %v760 = vsel %vm753, %v756, %v759
        %v761 = vsel %vm751, nan, %v760
        %v762 = vand.u32 2147483647, %v145
        %vm763 = vcmp.le.f32.partialorder %v762, 0.7853982
        %vm764 = vcmp.lt.s32.totalorder %v145, 0
        %v765 = vand.u32 %v145, 2139095040
        %v766 = vshrl.u32 %v765, 23
        %v767 = vsub.s32 %v766, 127
        %v768 = vand.u32 2147483647, %v145
        %v769 = vand.u32 %v768, 8388607
        %v770 = vor.u32 %v769, 8388608
        %v771 = vsub.s32 0, %v770
        %v772 = vadd.s32 %v767, 1
        %vm773 = vcmp.gt.s32.totalorder %v772, 0
        %v774 = vsel %vm773, %v772, 0
        %v775 = vshrl.u32 %v774, 5
        %v776 = vand.u32 %v774, 31
        %v777 = vsub.s32 32, %v776
        %v778 = vshrl.u32 683565275, %v777
        %v779 = vshll.u32 683565275, %v776
        %v780 = vshrl.u32 2475754826, %v777
        %v781 = vor.u32 %v779, %v780
        %v782 = vshll.u32 2475754826, %v776
        %v783 = vshrl.u32 2131351028, %v777
        %v784 = vor.u32 %v782, %v783
        %v785 = vshll.u32 2131351028, %v776
        %v786 = vshrl.u32 2102212464, %v777
        %v787 = vor.u32 %v785, %v786
        %v788 = vshll.u32 2102212464, %v776
        %v789 = vshrl.u32 920167782, %v777
        %v790 = vor.u32 %v788, %v789
        %v791 = vshll.u32 920167782, %v776
        %v792 = vshrl.u32 1326507024, %v777
        %v793 = vor.u32 %v791, %v792
        %vm794 = vcmp.lt.s32.totalorder %v775, 1
        %vm795 = vcmp.lt.s32.totalorder %v775, 2
        %vm796 = vcmp.lt.s32.totalorder %v775, 3
        %vm797 = vcmp.lt.s32.totalorder %v775, 4
        %v798 = vsel %vm794, %v778, %v781
        %v799 = vsel %vm797, %v787, 2102212464
        %v800 = vsel %vm796, %v784, %v799
        %v801 = vsel %vm795, %v798, %v800
        %v802 = vsel %vm794, %v781, %v784
        %v803 = vsel %vm797, %v790, 920167782
        %v804 = vsel %vm796, %v787, %v803
        %v805 = vsel %vm795, %v802, %v804
        %v806 = vsel %vm794, %v784, %v787
        %v807 = vsel %vm797, %v793, 1326507024
        %v808 = vsel %vm796, %v790, %v807
        %v809 = vsel %vm795, %v806, %v808
        %v810 = vshll.u32 %v770, 8
        %v811 = vand.u32 %v810, 65535
        %v812 = vshrl.u32 %v810, 16
        %v813 = vand.u32 %v809, 65535
        %v814 = vshrl.u32 %v809, 16
        %v815 = vmul.u32 %v811, %v813
        %v816 = vmul.u32 %v811, %v814
        %v817 = vmul.u32 %v812, %v813
        %v818 = vmul.u32 %v812, %v814
        %v819 = vshll.u32 %v816, 16
        %v820 = vshrl.u32 %v816, 16
        %v821 = vshll.u32 %v817, 16
        %v822 = vshrl.u32 %v817, 16
        %vm823 = vc.u32 %v815, %v819
        %v824 = vsel %vm823, 1, 0
        %v825 = vadd.s32 %v815, %v819
        %v826 = vadd.s32 %v818, %v824
        %vm827 = vc.u32 %v825, %v821
        %v828 = vsel %vm827, 1, 0
        %v829 = vadd.s32 %v825, %v821
        %v830 = vadd.s32 %v826, %v828
        %v831 = vadd.s32 %v830, %v820
        %v832 = vadd.s32 %v831, %v822
        %v833 = vand.u32 %v810, 65535
        %v834 = vshrl.u32 %v810, 16
        %v835 = vand.u32 %v805, 65535
        %v836 = vshrl.u32 %v805, 16
        %v837 = vmul.u32 %v833, %v835
        %v838 = vmul.u32 %v833, %v836
        %v839 = vmul.u32 %v834, %v835
        %v840 = vmul.u32 %v834, %v836
        %v841 = vshll.u32 %v838, 16
        %v842 = vshrl.u32 %v838, 16
        %v843 = vshll.u32 %v839, 16
        %v844 = vshrl.u32 %v839, 16
        %vm845 = vc.u32 %v837, %v841
        %v846 = vsel %vm845, 1, 0
        %v847 = vadd.s32 %v837, %v841
        %v848 = vadd.s32 %v840, %v846
        %vm849 = vc.u32 %v847, %v843
        %v850 = vsel %vm849, 1, 0
        %v851 = vadd.s32 %v847, %v843
        %v852 = vadd.s32 %v848, %v850
        %v853 = vadd.s32 %v852, %v842
        %v854 = vadd.s32 %v853, %v844
        %v855 = vmul.u32 %v810, %v801
        %v856 = vadd.s32 %v832, %v851
        %vm857 = vc.u32 %v832, %v851
        %v858 = vadd.s32 %v854, 1
        %v859 = vsel %vm857, %v858, %v854
        %v860 = vadd.s32 %v855, %v859
        %v861 = vadd.s32 %v860, 536870912
        %v862 = vshrl.u32 %v861, 30
        %v863 = vshll.u32 %v862, 30
        %v864 = vsub.s32 %v860, %v863
        %vm865 = vcmp.lt.s32.totalorder %v864, 0
        %v866 = vsub.s32 0, %v864
        %v867 = vsel %vm865, %v866, %v864
        %v868 = vclz %v867
        %v869 = vsub.s32 %v868, 2
        %vm870 = vcmp.gt.s32.totalorder 0, %v869
        %v871 = vsel %vm870, 0, %v869
        %v872 = vsub.s32 32, %v871
        %v873 = vshll.u32 %v864, %v871
        %v874 = vshrl.u32 %v856, %v872
        %v875 = vor.u32 %v873, %v874
        %v876 = vsub.s32 4294967266, %v871
        %v877 = vadd.s32 %v876, 127
        %v878 = vshll.u32 %v877, 23
        %v879 = vor.u32 4788187, %v878
        %v880 = vand.u32 2147483647, %v879
        %v882 = vcvt.s32.f32 %v875
        %v883 = vmul.f32 %v882, %v880
        %v884 = vxor.u32 %v883, 2147483648
        %v885 = vsel %vm764, %v884, %v883
        %v886 = vsub.s32 4, %v862
        %v887 = vsel %vm764, %v886, %v862
        %v888 = vsel %vm763, %v145, %v885
        %v889 = vsel %vm763, 0, %v887
        %v890 = vmul.f32 %v888, %v888
        %v891 = vmul.f32 %v890, -0.001358992
        %v892 = vadd.f32 %v891, 0.041655596
        %v893 = vmul.f32 %v890, %v892
        %v894 = vadd.f32 %v893, -0.4999988
        %v895 = vmul.f32 %v890, %v894
        %v896 = vadd.f32 1.0, %v895
        %v897 = vmul.f32 %v888, %v888
        %v898 = vmul.f32 %v897, -0.00019511016
        %v899 = vadd.f32 %v898, 0.008332121
        %v900 = vmul.f32 %v897, %v899
        %v901 = vadd.f32 %v900, -0.16666654
        %v902 = vmul.f32 %v897, %v901
        %v903 = vadd.f32 %v902, 1.0
        %v904 = vmul.f32 %v903, %v888
        %vm905 = vweird.f32 %v145
        %v906 = vand.u32 %v889, 3
        %vm907 = vcmp.lt.s32.totalorder %v906, 2
        %vm908 = vcmp.eq.s32.totalorder %v906, 0
        %v909 = vxor.u32 %v904, 2147483648
        %v910 = vsel %vm908, %v896, %v909
        %vm911 = vcmp.eq.s32.totalorder %v906, 2
        %v912 = vxor.u32 %v896, 2147483648
        %v913 = vsel %vm911, %v912, %v904
        %v914 = vsel %vm907, %v910, %v913
        %v915 = vsel %vm905, nan, %v914
        %v916 = vsub.f32 1.0, %v299
        %v917 = vsub.f32 1.0, %v453
        %v918 = vsub.f32 1.0, %v607
        %v919 = vsub.f32 1.0, %v761
        %v920 = vsub.f32 1.0, %v915
        %v921 = vmul.f32 %v916, 0.5
        %v922 = vmul.f32 %v917, 0.5
        %v923 = vmul.f32 %v918, 0.5
        %v924 = vmul.f32 %v919, 0.5
        %v925 = vmul.f32 %v920, 0.5
        %v926 = vmul.f32 %v921, %v922
        %v927 = vmul.f32 %v136, %v136
        %v928 = vmul.f32 %v137, %v137
        %v929 = vadd.f32 %v927, %v928
        %v930 = vmul.f32 %v929, 0.05
        %v931 = vadd.f32 %v926, %v930
        %v932 = vmul.f32 %v922, %v923
        %v933 = vadd.f32 %v931, %v932
        %v934 = vmul.f32 %v138, %v138
        %v935 = vadd.f32 %v928, %v934
        %v936 = vmul.f32 %v935, 0.05
        %v937 = vadd.f32 %v933, %v936
        %v938 = vmul.f32 %v923, %v924
        %v939 = vadd.f32 %v937, %v938
        %v940 = vmul.f32 %v139, %v139
        %v941 = vadd.f32 %v934, %v940
        %v942 = vmul.f32 %v941, 0.05
        %v943 = vadd.f32 %v939, %v942
        %v944 = vmul.f32 %v924, %v925
        %v945 = vadd.f32 %v943, %v944
        %v946 = vmul.f32 %v140, %v140
        %v947 = vadd.f32 %v940, %v946
        %v948 = vmul.f32 %v947, 0.05
        %v949 = vadd.f32 %v945, %v948
        %950 = vst [vmem:[%s135] sm:$0xff] %v949
        %s951 = sand.u32 %s52, 1
        %s952 = scalar_lea.sflag [#allocation4], %s951
        %s953 = sand.u32 %s52, 1
        %s954 = smul.addr %s953, 8
        %s955 = scalar_lea.vmem [#allocation5], %s954
        // Predicated region
        $region29: #{tpu_custom_call.1} parent=23 // pred_check
          %p956 = pneg %p62
        $region30: #{tpu_custom_call.1} parent=23 // pred_check_branch
          %958 = sbr.rel (%p956) target = $region32
        $region31: #{tpu_custom_call.1} parent=23 // pred_region
          %960 = vsyncadd %s952, 0
          %s961 = smul.addr %s18, 8
          %s962 = scalar_lea.hbm %s1, %s961
          %s964 = sshll.u32 %s955, 4
          %s965 = int_to_ptr.vmem [resolvable:$true] %s964
          %s966 = sshll.u32 %s962, 4
          %s967 = int_to_ptr.hbm [resolvable:$true] %s966
          %969 = dma.vmem_to_hbm [thread:$0]  %s965, 128, %s967, %s952
        $region32: #{tpu_custom_call.1} parent=23 // pred_fallthru
          _
      $region24: #{tpu_custom_call.1} parent=5 // pred_fallthru
        _
      %p970 = scmp.le.s32.totalorder 2, %s13
      // Predicated region
      $region33: #{tpu_custom_call.1} parent=5 // pred_check
        %p971 = pneg %p970
      $region34: #{tpu_custom_call.1} parent=5 // pred_check_branch
        %973 = sbr.rel (%p971) target = $region36
      $region35: #{tpu_custom_call.1} parent=5 // pred_region
        %s974 = ssub.s32 %s13, 2
        // Predicated region
        $region37: #{tpu_custom_call.1} parent=35 // pred_check
          %p975 = pneg %p68
        $region38: #{tpu_custom_call.1} parent=35 // pred_check_branch
          %977 = sbr.rel (%p975) target = $region40
        $region39: #{tpu_custom_call.1} parent=35 // pred_region
          %s978 = sand.u32 %s53, 1
          %s979 = scalar_lea.sflag [#allocation4], %s978
          %s980 = sand.u32 %s53, 1
          %s981 = smul.addr %s980, 8
          %s982 = scalar_lea.vmem [#allocation5], %s981
          %984 = dma.done %s979, 128
        $region40: #{tpu_custom_call.1} parent=35 // pred_fallthru
          _
      $region36: #{tpu_custom_call.1} parent=5 // pred_fallthru
        _
    $region6: #{tpu_custom_call.1} parent=1 // loop_footer
      %s17 = sadd.s32 1, %s13
    $region7: #{tpu_custom_call.1} parent=1 // loop_footer_branch
      %12 = sbr.rel target = $region3
    $region8: #{tpu_custom_call.1} parent=1 // loop_exit
      _
    %985 = vsyncpa [#allocation3], 1
    %s986 = scalar_lea.sflag [#allocation3], 1
    %987 = vsyncpa %s986, 1
    %988 = vsyncpa [#allocation4], 1
    %s989 = scalar_lea.sflag [#allocation4], 1
    %990 = vsyncpa %s989, 1

</llo_original>
